<compile_context>
chip_gen: v5e
topology: v5e:2x2
jax: 0.10.0
libtpu: 0.0.40
codegen_flags: <defaults>
</compile_context>

<pallas_src>
import math

import jax
import jax.numpy as jnp
from jax.experimental import pallas as pl
from jax.experimental.pallas import tpu as pltpu

LEVELS = (8, 6, 5)
EPS = 1e-3


def _fsq_host_constants(levels):
    """Host-side FSQ constants as (1, C) float32 rows."""
    half_l = [(l - 1) * (1 + EPS) / 2.0 for l in levels]
    offset = [0.5 if (l % 2 == 0) else 0.0 for l in levels]
    shift = [math.atanh(o / h) for o, h in zip(offset, half_l)]
    half_width = [float(l // 2) for l in levels]
    row = lambda v: jnp.asarray(v, dtype=jnp.float32).reshape(1, len(levels))
    return row(half_l), row(offset), row(shift), row(half_width)


def _fsq_kernel(x_ref, w_in_ref, b_in_ref, w_out_ref, b_out_ref,
                half_l_ref, offset_ref, o_ref):
    # x block: (1, tm, D) -> (tm, D)
    x = x_ref[0]

    # project_in: (tm, D) @ (D, C) -> (tm, C); b_in already includes FSQ shift.
    z = jnp.dot(x, w_in_ref[...], preferred_element_type=jnp.float32)
    z = z + b_in_ref[...]

    # FSQ bound + quantize (forward path of round_ste). The 1/half_width
    # scale is pre-folded into W_out on the host, so only a round() remains.
    bounded = jnp.tanh(z) * half_l_ref[...] - offset_ref[...]
    codes = jnp.round(bounded)

    # project_out: (tm, C) @ (C, D) -> (tm, D)
    out = jnp.dot(codes, w_out_ref[...], preferred_element_type=jnp.float32)
    out = out + b_out_ref[...]

    # Fused permute(0, 2, 1): store (D, tm) so the call emits (B, D, T) directly.
    o_ref[0] = out.T.astype(o_ref.dtype)


def _pick_time_tile(B, T, tmax=8192):
    """Pick the time tile: big (~1 MiB blocks), (8,128)-legal, >=2 grid steps."""
    if T > tmax:
        return tmax                              # multiple of 128
    if B == 1 and T >= 256:
        # Keep at least 2 grid steps so both v7x TensorCores get work.
        half = -(-T // 2)
        return -(-half // 128) * 128             # round up to multiple of 128
    return T                                     # block == full dim: always legal


def fsq_wrapper_forward(x, w_in, b_in, w_out, b_out, *, levels=LEVELS,
                        time_tile=None):
    """x: (B, T, D) float32. Returns (quant (B, D, T), emb_loss scalar, info ())."""
    B, T, D = x.shape
    C = len(levels)
    assert w_in.shape == (D, C) and w_out.shape == (C, D)

    half_l, offset, shift, half_width = _fsq_host_constants(levels)
    # Fold the FSQ shift into the input bias and the 1/half_width quantizer
    # scale into the output projection rows.
    b_in_eff = b_in.reshape(1, C).astype(jnp.float32) + shift
    w_out_eff = w_out.astype(jnp.float32) / half_width.reshape(C, 1)
    b_out2 = b_out.reshape(1, D).astype(jnp.float32)

    tm = time_tile if time_tile is not None else _pick_time_tile(B, T)
    grid = (B, pl.cdiv(T, tm))

    quant = pl.pallas_call(
        _fsq_kernel,
        out_shape=jax.ShapeDtypeStruct((B, D, T), jnp.float32),
        grid=grid,
        in_specs=[
            pl.BlockSpec((1, tm, D), lambda b, t: (b, t, 0)),   # x time-tile
            pl.BlockSpec((D, C), lambda b, t: (0, 0)),          # W_in
            pl.BlockSpec((1, C), lambda b, t: (0, 0)),          # b_in + shift
            pl.BlockSpec((C, D), lambda b, t: (0, 0)),          # W_out / half_width
            pl.BlockSpec((1, D), lambda b, t: (0, 0)),          # b_out
            pl.BlockSpec((1, C), lambda b, t: (0, 0)),          # half_l
            pl.BlockSpec((1, C), lambda b, t: (0, 0)),          # offset
        ],
        out_specs=pl.BlockSpec((1, D, tm), lambda b, t: (b, 0, t)),
        compiler_params=pltpu.CompilerParams(
            dimension_semantics=("parallel", "parallel")),
    )(x.astype(jnp.float32), w_in.astype(jnp.float32), b_in_eff,
      w_out_eff, b_out2, half_l, offset)

    emb_loss = jnp.float32(0.0)   # TODO(synk): PyTorch returns a requires_grad=True 0-tensor; forward value only here.
    info = ()
    return quant, emb_loss, info


def _reference(x, w_in, b_in, w_out, b_out, levels=LEVELS):
    """Pure-JAX reference of the same forward (original, unfolded formula)."""
    half_l, offset, shift, half_width = _fsq_host_constants(levels)
    z = x @ w_in + b_in
    bounded = jnp.tanh(z + shift) * half_l - offset
    codes = jnp.round(bounded) / half_width
    out = codes @ w_out + b_out
    B, T, D = x.shape
    return jnp.transpose(out, (0, 2, 1)).reshape(B, D, -1)


if __name__ == "__main__":
    B, T, D = 2, 8, 32      # batch, time, latent_dim (c_in == latent_dim)
    C = len(LEVELS)

    key = jax.random.PRNGKey(0)
    kx, k1, k2, k3, k4 = jax.random.split(key, 5)

    x = jax.random.normal(kx, (B, T, D), dtype=jnp.float32)

    # nn.Linear-style deterministic init: U(-1/sqrt(fan_in), 1/sqrt(fan_in))
    lim_in = 1.0 / math.sqrt(D)
    lim_out = 1.0 / math.sqrt(C)
    w_in = jax.random.uniform(k1, (D, C), jnp.float32, -lim_in, lim_in)
    b_in = jax.random.uniform(k2, (C,), jnp.float32, -lim_in, lim_in)
    w_out = jax.random.uniform(k3, (C, D), jnp.float32, -lim_out, lim_out)
    b_out = jax.random.uniform(k4, (D,), jnp.float32, -lim_out, lim_out)

    quant, emb_loss, info = fsq_wrapper_forward(x, w_in, b_in, w_out, b_out)
    jax.block_until_ready(quant)

    ref = _reference(x, w_in, b_in, w_out, b_out)
    assert quant.shape == (B, D, T), quant.shape
    assert emb_loss.shape == ()
    assert info == ()
    assert jnp.allclose(quant, ref, atol=1e-3), float(jnp.max(jnp.abs(quant - ref)))

    print("KERNEL_OK")
</pallas_src>

<mosaic_0001>
module attributes {stable_mosaic.version = 11 : i64} {
  func.func @_fsq_kernel(%arg0: i32, %arg1: i32, %arg2: memref<1x8x32xf32, #tpu.memory_space<vmem>>, %arg3: memref<32x3xf32, #tpu.memory_space<vmem>>, %arg4: memref<1x3xf32, #tpu.memory_space<vmem>>, %arg5: memref<3x32xf32, #tpu.memory_space<vmem>>, %arg6: memref<1x32xf32, #tpu.memory_space<vmem>>, %arg7: memref<1x3xf32, #tpu.memory_space<vmem>>, %arg8: memref<1x3xf32, #tpu.memory_space<vmem>>, %arg9: memref<1x32x8xf32, #tpu.memory_space<vmem>>) attributes {dimension_semantics = [#tpu.dimension_semantics<parallel>, #tpu.dimension_semantics<parallel>], iteration_bounds = array<i64: 2, 1>, scalar_prefetch = 0 : i64, scratch_operands = 0 : i64, tpu.core_type = #tpu.core_type<tc>, window_params = [{transform_indices = @transform_0, window_bounds = array<i64: 1, 8, 32>}, {pipeline_mode = #tpu.pipeline_mode<synchronous>, transform_indices = @transform_1, window_bounds = array<i64: 32, 3>}, {pipeline_mode = #tpu.pipeline_mode<synchronous>, transform_indices = @transform_2, window_bounds = array<i64: 1, 3>}, {pipeline_mode = #tpu.pipeline_mode<synchronous>, transform_indices = @transform_3, window_bounds = array<i64: 3, 32>}, {pipeline_mode = #tpu.pipeline_mode<synchronous>, transform_indices = @transform_4, window_bounds = array<i64: 1, 32>}, {pipeline_mode = #tpu.pipeline_mode<synchronous>, transform_indices = @transform_5, window_bounds = array<i64: 1, 3>}, {pipeline_mode = #tpu.pipeline_mode<synchronous>, transform_indices = @transform_6, window_bounds = array<i64: 1, 3>}, {transform_indices = @transform_7, window_bounds = array<i64: 1, 32, 8>}]} {
    %c0 = arith.constant 0 : index
    %c0_0 = arith.constant 0 : index
    %c0_1 = arith.constant 0 : index
    %0 = vector.load %arg2[%c0, %c0_0, %c0_1] : memref<1x8x32xf32, #tpu.memory_space<vmem>>, vector<1x8x32xf32>
    %1 = vector.shape_cast %0 : vector<1x8x32xf32> to vector<8x32xf32>
    %c0_2 = arith.constant 0 : index
    %c0_3 = arith.constant 0 : index
    %2 = vector.load %arg3[%c0_2, %c0_3] : memref<32x3xf32, #tpu.memory_space<vmem>>, vector<32x3xf32>
    %cst = arith.constant dense<0.000000e+00> : vector<8x3xf32>
    %3 = tpu.matmul %1, %2, %cst {dimension_numbers = #tpu.dot_dimension_numbers<[1], [0], [0], [1], [0, 0, 1, 1], [], []>} : vector<8x32xf32>, vector<32x3xf32>, vector<8x3xf32> -> vector<8x3xf32>
    %c0_4 = arith.constant 0 : index
    %c0_5 = arith.constant 0 : index
    %4 = vector.load %arg4[%c0_4, %c0_5] : memref<1x3xf32, #tpu.memory_space<vmem>>, vector<1x3xf32>
    %5 = vector.broadcast %4 : vector<1x3xf32> to vector<8x3xf32>
    %6 = arith.addf %3, %5 : vector<8x3xf32>
    %7 = math.tanh %6 : vector<8x3xf32>
    %c0_6 = arith.constant 0 : index
    %c0_7 = arith.constant 0 : index
    %8 = vector.load %arg7[%c0_6, %c0_7] : memref<1x3xf32, #tpu.memory_space<vmem>>, vector<1x3xf32>
    %9 = vector.broadcast %8 : vector<1x3xf32> to vector<8x3xf32>
    %10 = arith.mulf %7, %9 : vector<8x3xf32>
    %c0_8 = arith.constant 0 : index
    %c0_9 = arith.constant 0 : index
    %11 = vector.load %arg8[%c0_8, %c0_9] : memref<1x3xf32, #tpu.memory_space<vmem>>, vector<1x3xf32>
    %12 = vector.broadcast %11 : vector<1x3xf32> to vector<8x3xf32>
    %13 = arith.subf %10, %12 : vector<8x3xf32>
    %14 = math.roundeven %13 : vector<8x3xf32>
    %c0_10 = arith.constant 0 : index
    %c0_11 = arith.constant 0 : index
    %15 = vector.load %arg5[%c0_10, %c0_11] : memref<3x32xf32, #tpu.memory_space<vmem>>, vector<3x32xf32>
    %cst_12 = arith.constant dense<0.000000e+00> : vector<8x32xf32>
    %16 = tpu.matmul %14, %15, %cst_12 {dimension_numbers = #tpu.dot_dimension_numbers<[1], [0], [0], [1], [0, 0, 1, 1], [], []>} : vector<8x3xf32>, vector<3x32xf32>, vector<8x32xf32> -> vector<8x32xf32>
    %c0_13 = arith.constant 0 : index
    %c0_14 = arith.constant 0 : index
    %17 = vector.load %arg6[%c0_13, %c0_14] : memref<1x32xf32, #tpu.memory_space<vmem>>, vector<1x32xf32>
    %18 = vector.broadcast %17 : vector<1x32xf32> to vector<8x32xf32>
    %19 = arith.addf %16, %18 : vector<8x32xf32>
    %20 = tpu.transpose %19, [1, 0] : vector<8x32xf32> -> vector<32x8xf32>
    %c0_15 = arith.constant 0 : index
    %c0_16 = arith.constant 0 : index
    %c0_17 = arith.constant 0 : index
    %21 = vector.load %arg9[%c0_15, %c0_16, %c0_17] : memref<1x32x8xf32, #tpu.memory_space<vmem>>, vector<1x32x8xf32>
    %22 = vector.shape_cast %21 : vector<1x32x8xf32> to vector<32x8xf32>
    %23 = vector.shape_cast %20 : vector<32x8xf32> to vector<1x32x8xf32>
    tpu.vector_store %arg9[%c0_15, %c0_16, %c0_17], %23 {strides = array<i32>} : memref<1x32x8xf32, #tpu.memory_space<vmem>>, vector<1x32x8xf32>,
    return
  }
  func.func @transform_0(%arg0: i32, %arg1: i32) -> (i32, i32, i32) {
    %c0_i32 = arith.constant 0 : i32
    %c0_i32_0 = arith.constant 0 : i32
    return %arg0, %arg1, %c0_i32 : i32, i32, i32
  }
  func.func @transform_1(%arg0: i32, %arg1: i32) -> (i32, i32) {
    %c0_i32 = arith.constant 0 : i32
    %c0_i32_0 = arith.constant 0 : i32
    %c0_i32_1 = arith.constant 0 : i32
    return %c0_i32, %c0_i32_0 : i32, i32
  }
  func.func @transform_2(%arg0: i32, %arg1: i32) -> (i32, i32) {
    %c0_i32 = arith.constant 0 : i32
    %c0_i32_0 = arith.constant 0 : i32
    %c0_i32_1 = arith.constant 0 : i32
    return %c0_i32, %c0_i32_0 : i32, i32
  }
  func.func @transform_3(%arg0: i32, %arg1: i32) -> (i32, i32) {
    %c0_i32 = arith.constant 0 : i32
    %c0_i32_0 = arith.constant 0 : i32
    %c0_i32_1 = arith.constant 0 : i32
    return %c0_i32, %c0_i32_0 : i32, i32
  }
  func.func @transform_4(%arg0: i32, %arg1: i32) -> (i32, i32) {
    %c0_i32 = arith.constant 0 : i32
    %c0_i32_0 = arith.constant 0 : i32
    %c0_i32_1 = arith.constant 0 : i32
    return %c0_i32, %c0_i32_0 : i32, i32
  }
  func.func @transform_5(%arg0: i32, %arg1: i32) -> (i32, i32) {
    %c0_i32 = arith.constant 0 : i32
    %c0_i32_0 = arith.constant 0 : i32
    %c0_i32_1 = arith.constant 0 : i32
    return %c0_i32, %c0_i32_0 : i32, i32
  }
  func.func @transform_6(%arg0: i32, %arg1: i32) -> (i32, i32) {
    %c0_i32 = arith.constant 0 : i32
    %c0_i32_0 = arith.constant 0 : i32
    %c0_i32_1 = arith.constant 0 : i32
    return %c0_i32, %c0_i32_0 : i32, i32
  }
  func.func @transform_7(%arg0: i32, %arg1: i32) -> (i32, i32, i32) {
    %c0_i32 = arith.constant 0 : i32
    %c0_i32_0 = arith.constant 0 : i32
    return %arg0, %c0_i32, %arg1 : i32, i32, i32
  }
}

</mosaic_0001>

<llo_original>
// kernel: tpu_custom_call.1
$region0: #{tpu_custom_call.1}
  #allocation0 [shape = 'u32[]', space=smem, size = 0x4, offset = 0x4, fixed_abs, tag = 'smem constant byte address 0x4 - core index']
  #allocation1 [shape = 'u32[72,128]{1,0:T(1,128)}', space=vmem, size = 0x9000, scoped, tag = 'internal scratch']
  %s0 = inlined_call_operand.vmem [shape: f32[2,8,32], index: 0, kind: input, shape index: {}]
  %s1 = inlined_call_operand.vmem [shape: f32[32,3], index: 1, kind: input, shape index: {}]
  %s2 = inlined_call_operand.vmem [shape: f32[1,3], index: 2, kind: input, shape index: {}]
  %s3 = inlined_call_operand.vmem [shape: f32[3,32], index: 3, kind: input, shape index: {}]
  %s4 = inlined_call_operand.vmem [shape: f32[1,32], index: 4, kind: input, shape index: {}]
  %s5 = inlined_call_operand.vmem [shape: f32[1,3], index: 5, kind: input, shape index: {}]
  %s6 = inlined_call_operand.vmem [shape: f32[1,3], index: 6, kind: input, shape index: {}]
  %s7 = inlined_call_operand.vmem [shape: f32[2,32,8], index: 7, kind: output, shape index: {}]
  %s8 = sld [smem:[#allocation0]]
  $region61: #{tpu_custom_call.1} parent=0
    _
  %s10 = ssub.s32 1, %s8
  %s11 = scalar_select 0, %s10, %s8
  loop: start=0, step=1, limit=4
  $region2: #{tpu_custom_call.1} parent=0 // loop_pre_header
    _
  $region3: #{tpu_custom_call.1} parent=0 // loop_header
    %s13 = sphi 0, %s17
    %p14 = scmp.ge.s32.totalorder %s13, 4
    %s20 = sphi 0, %s32
    %s21 = sphi 0, %s28
    %s22 = sphi 0, %s20
    %s23 = sphi 0, %s21
    %s24 = sphi 0, %s22
    %s25 = sphi 0, %s23
    %s37 = sphi 0, %s39
    %s40 = sphi 0, %s37
    %s41 = sphi 0, %s40
    %s57 = sphi 0, %s41
    %s61 = sphi 0, %s61
    %s63 = sphi 0, %s61
    %s64 = sphi 0, %s63
    %s78 = sphi 0, %s64
    %s82 = sphi 0, %s82
    %s84 = sphi 0, %s82
    %s85 = sphi 0, %s84
    %s99 = sphi 0, %s85
    %s103 = sphi 0, %s103
    %s105 = sphi 0, %s103
    %s106 = sphi 0, %s105
    %s120 = sphi 0, %s106
    %s124 = sphi 0, %s124
    %s126 = sphi 0, %s124
    %s127 = sphi 0, %s126
    %s141 = sphi 0, %s127
    %s145 = sphi 0, %s145
    %s147 = sphi 0, %s145
    %s148 = sphi 0, %s147
    %s162 = sphi 0, %s148
    %s166 = sphi 0, %s166
    %s168 = sphi 0, %s166
    %s169 = sphi 0, %s168
    %s183 = sphi 0, %s169
    %s191 = sphi 0, %s193
    %s194 = sphi 0, %s191
    %s195 = sphi 0, %s194
    %s211 = sphi 0, %s195
  $region4: #{tpu_custom_call.1} parent=0 // loop_header_branch
    %16 = sbr.rel (%p14) target = $region8
  $region5: #{tpu_custom_call.1} parent=0 // loop_body
    %s18 = ssub.s32 %s13, 1
    %s19 = ssub.s32 %s13, 2
    %s26 = sadd.s32 1, %s21
    %p27 = scmp.ge.s32.totalorder %s26, 1
    %s28 = scalar_select %p27, 0, %s26
    %s29 = sadd.s32 1, %s20
    %s30 = scalar_select %p27, %s29, %s20
    %p31 = scmp.ge.s32.totalorder %s30, 2
    %s32 = scalar_select %p31, 0, %s30
    %s33 = ssub.s32 %s20, %s32
    %s34 = ssub.s32 %s21, %s28
    %s35 = sor.u32 %s33, %s34
    %p36 = scmp.eq.s32.totalorder %s35, 0
    %s38 = sadd.s32 %s37, 1
    %s39 = scalar_select %p36, %s37, %s38
    %p42 = pneg %p36
    %p43 = scmp.eq.s32.totalorder %s13, 1
    %p44 = por %p42, %p43
    %p45 = scmp.ne.s32.totalorder %s37, %s40
    %p46 = scmp.eq.s32.totalorder %s13, 0
    %p47 = por %p45, %p46
    %p48 = scmp.ne.s32.totalorder %s37, %s40
    %p49 = scmp.eq.s32.totalorder %s18, 1
    %p50 = por %p48, %p49
    %p51 = scmp.ne.s32.totalorder %s40, %s41
    %p52 = scmp.eq.s32.totalorder %s18, 0
    %p53 = por %p51, %p52
    %p54 = scmp.ne.s32.totalorder %s40, %s41
    %p55 = scmp.eq.s32.totalorder %s19, 1
    %p56 = por %p54, %p55
    %p58 = scmp.ne.s32.totalorder %s41, %s57
    %p59 = scmp.eq.s32.totalorder %s19, 0
    %p60 = por %p58, %p59
    %s62 = sadd.s32 %s61, 1
    %p65 = scmp.eq.s32.totalorder %s13, 1
    %p66 = scmp.ne.s32.totalorder %s61, %s63
    %p67 = scmp.eq.s32.totalorder %s13, 0
    %p68 = por %p66, %p67
    %p69 = scmp.ne.s32.totalorder %s61, %s63
    %p70 = scmp.eq.s32.totalorder %s18, 1
    %p71 = por %p69, %p70
    %p72 = scmp.ne.s32.totalorder %s63, %s64
    %p73 = scmp.eq.s32.totalorder %s18, 0
    %p74 = por %p72, %p73
    %p75 = scmp.ne.s32.totalorder %s63, %s64
    %p76 = scmp.eq.s32.totalorder %s19, 1
    %p77 = por %p75, %p76
    %p79 = scmp.ne.s32.totalorder %s64, %s78
    %p80 = scmp.eq.s32.totalorder %s19, 0
    %p81 = por %p79, %p80
    %s83 = sadd.s32 %s82, 1
    %p86 = scmp.eq.s32.totalorder %s13, 1
    %p87 = scmp.ne.s32.totalorder %s82, %s84
    %p88 = scmp.eq.s32.totalorder %s13, 0
    %p89 = por %p87, %p88
    %p90 = scmp.ne.s32.totalorder %s82, %s84
    %p91 = scmp.eq.s32.totalorder %s18, 1
    %p92 = por %p90, %p91
    %p93 = scmp.ne.s32.totalorder %s84, %s85
    %p94 = scmp.eq.s32.totalorder %s18, 0
    %p95 = por %p93, %p94
    %p96 = scmp.ne.s32.totalorder %s84, %s85
    %p97 = scmp.eq.s32.totalorder %s19, 1
    %p98 = por %p96, %p97
    %p100 = scmp.ne.s32.totalorder %s85, %s99
    %p101 = scmp.eq.s32.totalorder %s19, 0
    %p102 = por %p100, %p101
    %s104 = sadd.s32 %s103, 1
    %p107 = scmp.eq.s32.totalorder %s13, 1
    %p108 = scmp.ne.s32.totalorder %s103, %s105
    %p109 = scmp.eq.s32.totalorder %s13, 0
    %p110 = por %p108, %p109
    %p111 = scmp.ne.s32.totalorder %s103, %s105
    %p112 = scmp.eq.s32.totalorder %s18, 1
    %p113 = por %p111, %p112
    %p114 = scmp.ne.s32.totalorder %s105, %s106
    %p115 = scmp.eq.s32.totalorder %s18, 0
    %p116 = por %p114, %p115
    %p117 = scmp.ne.s32.totalorder %s105, %s106
    %p118 = scmp.eq.s32.totalorder %s19, 1
    %p119 = por %p117, %p118
    %p121 = scmp.ne.s32.totalorder %s106, %s120
    %p122 = scmp.eq.s32.totalorder %s19, 0
    %p123 = por %p121, %p122
    %s125 = sadd.s32 %s124, 1
    %p128 = scmp.eq.s32.totalorder %s13, 1
    %p129 = scmp.ne.s32.totalorder %s124, %s126
    %p130 = scmp.eq.s32.totalorder %s13, 0
    %p131 = por %p129, %p130
    %p132 = scmp.ne.s32.totalorder %s124, %s126
    %p133 = scmp.eq.s32.totalorder %s18, 1
    %p134 = por %p132, %p133
    %p135 = scmp.ne.s32.totalorder %s126, %s127
    %p136 = scmp.eq.s32.totalorder %s18, 0
    %p137 = por %p135, %p136
    %p138 = scmp.ne.s32.totalorder %s126, %s127
    %p139 = scmp.eq.s32.totalorder %s19, 1
    %p140 = por %p138, %p139
    %p142 = scmp.ne.s32.totalorder %s127, %s141
    %p143 = scmp.eq.s32.totalorder %s19, 0
    %p144 = por %p142, %p143
    %s146 = sadd.s32 %s145, 1
    %p149 = scmp.eq.s32.totalorder %s13, 1
    %p150 = scmp.ne.s32.totalorder %s145, %s147
    %p151 = scmp.eq.s32.totalorder %s13, 0
    %p152 = por %p150, %p151
    %p153 = scmp.ne.s32.totalorder %s145, %s147
    %p154 = scmp.eq.s32.totalorder %s18, 1
    %p155 = por %p153, %p154
    %p156 = scmp.ne.s32.totalorder %s147, %s148
    %p157 = scmp.eq.s32.totalorder %s18, 0
    %p158 = por %p156, %p157
    %p159 = scmp.ne.s32.totalorder %s147, %s148
    %p160 = scmp.eq.s32.totalorder %s19, 1
    %p161 = por %p159, %p160
    %p163 = scmp.ne.s32.totalorder %s148, %s162
    %p164 = scmp.eq.s32.totalorder %s19, 0
    %p165 = por %p163, %p164
    %s167 = sadd.s32 %s166, 1
    %p170 = scmp.eq.s32.totalorder %s13, 1
    %p171 = scmp.ne.s32.totalorder %s166, %s168
    %p172 = scmp.eq.s32.totalorder %s13, 0
    %p173 = por %p171, %p172
    %p174 = scmp.ne.s32.totalorder %s166, %s168
    %p175 = scmp.eq.s32.totalorder %s18, 1
    %p176 = por %p174, %p175
    %p177 = scmp.ne.s32.totalorder %s168, %s169
    %p178 = scmp.eq.s32.totalorder %s18, 0
    %p179 = por %p177, %p178
    %p180 = scmp.ne.s32.totalorder %s168, %s169
    %p181 = scmp.eq.s32.totalorder %s19, 1
    %p182 = por %p180, %p181
    %p184 = scmp.ne.s32.totalorder %s169, %s183
    %p185 = scmp.eq.s32.totalorder %s19, 0
    %p186 = por %p184, %p185
    %s187 = ssub.s32 %s20, %s32
    %s188 = ssub.s32 %s21, %s28
    %s189 = sor.u32 %s187, %s188
    %p190 = scmp.eq.s32.totalorder %s189, 0
    %s192 = sadd.s32 %s191, 1
    %s193 = scalar_select %p190, %s191, %s192
    %p196 = pneg %p190
    %p197 = scmp.eq.s32.totalorder %s13, 1
    %p198 = por %p196, %p197
    %p199 = scmp.ne.s32.totalorder %s191, %s194
    %p200 = scmp.eq.s32.totalorder %s13, 0
    %p201 = por %p199, %p200
    %p202 = scmp.ne.s32.totalorder %s191, %s194
    %p203 = scmp.eq.s32.totalorder %s18, 1
    %p204 = por %p202, %p203
    %p205 = scmp.ne.s32.totalorder %s194, %s195
    %p206 = scmp.eq.s32.totalorder %s18, 0
    %p207 = por %p205, %p206
    %p208 = scmp.ne.s32.totalorder %s194, %s195
    %p209 = scmp.eq.s32.totalorder %s19, 1
    %p210 = por %p208, %p209
    %p212 = scmp.ne.s32.totalorder %s195, %s211
    %p213 = scmp.eq.s32.totalorder %s19, 0
    %p214 = por %p212, %p213
    %p215 = scmp.le.s32.totalorder 1, %s13
    %p216 = scmp.lt.s32.totalorder %s13, 3
    %p217 = pnand %p215, %p216
    %p218 = pneg %p217
    // Predicated region
    $region9: #{tpu_custom_call.1} parent=5 // pred_check
      _
    $region10: #{tpu_custom_call.1} parent=5 // pred_check_branch
      %220 = sbr.rel (%p217) target = $region12
    $region11: #{tpu_custom_call.1} parent=5 // pred_region
      %s221 = ssub.s32 %s13, 1
      // Predicated region
      $region13: #{tpu_custom_call.1} parent=11 // pred_check
        %p222 = pneg %p74
      $region14: #{tpu_custom_call.1} parent=11 // pred_check_branch
        %224 = sbr.rel (%p222) target = $region16
      $region15: #{tpu_custom_call.1} parent=11 // pred_region
        _
      $region16: #{tpu_custom_call.1} parent=11 // pred_fallthru
        _
      // Predicated region
      $region17: #{tpu_custom_call.1} parent=11 // pred_check
        %p225 = pneg %p95
      $region18: #{tpu_custom_call.1} parent=11 // pred_check_branch
        %227 = sbr.rel (%p225) target = $region20
      $region19: #{tpu_custom_call.1} parent=11 // pred_region
        _
      $region20: #{tpu_custom_call.1} parent=11 // pred_fallthru
        _
      // Predicated region
      $region21: #{tpu_custom_call.1} parent=11 // pred_check
        %p228 = pneg %p116
      $region22: #{tpu_custom_call.1} parent=11 // pred_check_branch
        %230 = sbr.rel (%p228) target = $region24
      $region23: #{tpu_custom_call.1} parent=11 // pred_region
        _
      $region24: #{tpu_custom_call.1} parent=11 // pred_fallthru
        _
      // Predicated region
      $region25: #{tpu_custom_call.1} parent=11 // pred_check
        %p231 = pneg %p137
      $region26: #{tpu_custom_call.1} parent=11 // pred_check_branch
        %233 = sbr.rel (%p231) target = $region28
      $region27: #{tpu_custom_call.1} parent=11 // pred_region
        _
      $region28: #{tpu_custom_call.1} parent=11 // pred_fallthru
        _
      // Predicated region
      $region29: #{tpu_custom_call.1} parent=11 // pred_check
        %p234 = pneg %p158
      $region30: #{tpu_custom_call.1} parent=11 // pred_check_branch
        %236 = sbr.rel (%p234) target = $region32
      $region31: #{tpu_custom_call.1} parent=11 // pred_region
        _
      $region32: #{tpu_custom_call.1} parent=11 // pred_fallthru
        _
      // Predicated region
      $region33: #{tpu_custom_call.1} parent=11 // pred_check
        %p237 = pneg %p179
      $region34: #{tpu_custom_call.1} parent=11 // pred_check_branch
        %239 = sbr.rel (%p237) target = $region36
      $region35: #{tpu_custom_call.1} parent=11 // pred_region
        _
      $region36: #{tpu_custom_call.1} parent=11 // pred_fallthru
        _
    $region12: #{tpu_custom_call.1} parent=5 // pred_fallthru
      _
    %p240 = scmp.lt.s32.totalorder %s13, 2
    // Predicated region
    $region37: #{tpu_custom_call.1} parent=5 // pred_check
      %p241 = pneg %p240
    $region38: #{tpu_custom_call.1} parent=5 // pred_check_branch
      %243 = sbr.rel (%p241) target = $region40
    $region39: #{tpu_custom_call.1} parent=5 // pred_region
      // Predicated region
      $region41: #{tpu_custom_call.1} parent=39 // pred_check
        %p244 = pneg %p47
      $region42: #{tpu_custom_call.1} parent=39 // pred_check_branch
        %246 = sbr.rel (%p244) target = $region44
      $region43: #{tpu_custom_call.1} parent=39 // pred_region
        %p247 = scmp.lt.s32.totalorder %s20, 1
        %s248 = scalar_select %p247, %s20, 1
        %p249 = scmp.lt.s32.totalorder %s21, 0
        %s250 = scalar_select %p249, %s21, 0
        %s251 = sadd.s32 %s250, %s248
        %s252 = smul.addr %s251, 8
        %s253 = scalar_lea.vmem %s0, %s252
      $region44: #{tpu_custom_call.1} parent=39 // pred_fallthru
        _
    $region40: #{tpu_custom_call.1} parent=5 // pred_fallthru
      _
    %p254 = scmp.le.s32.totalorder 1, %s13
    %p255 = scmp.lt.s32.totalorder %s13, 3
    %p256 = pnand %p254, %p255
    %p257 = pneg %p256
    // Predicated region
    $region45: #{tpu_custom_call.1} parent=5 // pred_check
      _
    $region46: #{tpu_custom_call.1} parent=5 // pred_check_branch
      %259 = sbr.rel (%p256) target = $region48
    $region47: #{tpu_custom_call.1} parent=5 // pred_region
      %s260 = ssub.s32 %s13, 1
      %p261 = scmp.lt.s32.totalorder %s22, 1
      %s262 = scalar_select %p261, %s22, 1
      %p263 = scmp.lt.s32.totalorder %s23, 0
      %s264 = scalar_select %p263, %s23, 0
      %s265 = sadd.s32 %s264, %s262
      %s266 = smul.addr %s265, 8
      %s267 = scalar_lea.vmem %s0, %s266
      %p268 = pneg %p53
      %p269 = pneg %p50
      %p270 = pneg %p74
      %p271 = pneg %p71
      %p272 = pneg %p95
      %p273 = pneg %p92
      %p274 = pneg %p116
      %p275 = pneg %p113
      %p276 = pneg %p137
      %p277 = pneg %p134
      %p278 = pneg %p158
      %p279 = pneg %p155
      %p280 = pneg %p179
      %p281 = pneg %p176
      %p282 = pneg %p207
      %p283 = pneg %p204
      %p284 = scmp.lt.s32.totalorder %s22, 1
      %s285 = scalar_select %p284, %s22, 1
      %p286 = scmp.lt.s32.totalorder %s23, 0
      %s287 = scalar_select %p286, %s23, 0
      %s288 = smul.addr %s285, 4
      %s289 = sadd.s32 %s287, %s288
      %s290 = smul.addr %s289, 8
      %s291 = scalar_lea.vmem %s7, %s290
      %p292 = scmp.lt.s32.totalorder %s22, 1
      %s293 = scalar_select %p292, %s22, 1
      %p294 = scmp.lt.s32.totalorder %s23, 0
      %s295 = scalar_select %p294, %s23, 0
      %s296 = sadd.s32 %s295, %s293
      %s297 = smul.addr %s296, 8
      %s298 = scalar_lea.vmem %s0, %s297
      %p299 = scmp.lt.s32.totalorder %s22, 1
      %s300 = scalar_select %p299, %s22, 1
      %p301 = scmp.lt.s32.totalorder %s23, 0
      %s302 = scalar_select %p301, %s23, 0
      %s303 = smul.addr %s300, 4
      %s304 = sadd.s32 %s302, %s303
      %s305 = smul.addr %s304, 8
      %s306 = scalar_lea.vmem %s7, %s305
      %v307 = vld [vmem:[%s298] sm:$0xff]
      %v308 = vld [vmem:[%s1] sm:$0xff]
      %v309 = vld [vmem:[%s1 + $0x8] sm:$0xff]
      %v310 = vld [vmem:[%s1 + $0x10] sm:$0xff]
      %v311 = vld [vmem:[%s1 + $0x18] sm:$0xff]
      %v312 = vld [vmem:[%s2] sm:$0x1]
      %v314 = vperm.slane %v312, 0
      %vm316 = vcmask 261120
      %v318 = vsel %vm316, %v307, 0
      %320 = vmatpush.msra.mxu0 0.0
      %321 = vmatpush.msra.mxu0 0.0
      %322 = vmatpush.msra.mxu0 0.0
      %323 = vmatpush.msra.mxu0 0.0
      %324 = vmatpush.msra.mxu0 0.0
      %325 = vmatpush.msra.mxu0 0.0
      %326 = vmatpush.msra.mxu0 0.0
      %327 = vmatpush.msra.mxu0 0.0
      %328 = vmatpush.msra.mxu0 0.0
      %329 = vmatpush.msra.mxu0 0.0
      %330 = vmatpush.msra.mxu0 0.0
      %331 = vmatpush.msra.mxu0 0.0
      %332 = vmatpush.msra.mxu0 %v311
      %333 = vmatpush.msra.mxu0 %v310
      %334 = vmatpush.msra.mxu0 %v309
      %335 = vmatpush.msra.mxu0 %v308
      %336 = vmatmul.f32.gmra.mxu0 %v318
      %v337 = vpop.f32.mrf.mxu0
      %v338 = vadd.f32 %v314, %v337
      %339 = vdwg.mxu0
      %v340 = vtanh.pop %v338
      %v341 = vld [vmem:[%s5] sm:$0x1]
      %v343 = vperm.slane %v341, 0
      %v345 = vmul.f32 %v340, %v343
      %v346 = vld [vmem:[%s6] sm:$0x1]
      %v348 = vperm.slane %v346, 0
      %v350 = vsub.f32 %v345, %v348
      %v351 = vround.ne.pseudo %v350
      %v352 = vld [vmem:[%s3] sm:$0x7]
      %v353 = vld [vmem:[%s4] sm:$0x1]
      %v355 = vperm.slane %v353, 0
      %vm357 = vcmask 23552
      %v359 = vsel %vm357, %v351, 0
      %vm361 = vcmask 1042432
      %v363 = vsel %vm361, %v352, 0
      %365 = vmatpush.msra.mxu0 0.0
      %366 = vmatpush.msra.mxu0 0.0
      %367 = vmatpush.msra.mxu0 0.0
      %368 = vmatpush.msra.mxu0 0.0
      %369 = vmatpush.msra.mxu0 0.0
      %370 = vmatpush.msra.mxu0 0.0
      %371 = vmatpush.msra.mxu0 0.0
      %372 = vmatpush.msra.mxu0 0.0
      %373 = vmatpush.msra.mxu0 0.0
      %374 = vmatpush.msra.mxu0 0.0
      %375 = vmatpush.msra.mxu0 0.0
      %376 = vmatpush.msra.mxu0 0.0
      %377 = vmatpush.msra.mxu0 0.0
      %378 = vmatpush.msra.mxu0 0.0
      %379 = vmatpush.msra.mxu0 0.0
      %380 = vmatpush.msra.mxu0 %v363
      %381 = vmatmul.f32.gmra.mxu0 %v359
      %v382 = vpop.f32.mrf.mxu0
      %v383 = vadd.f32 %v355, %v382
      %384 = vdwg.mxu0
      %385 = vxpose.xlu0.b32.start [1/16] %v383, 128
      %386 = vxpose.xlu0.b32.cont [2/16] 0.0, 128
      %387 = vxpose.xlu0.b32.cont [3/16] 0.0, 128
      %388 = vxpose.xlu0.b32.cont [4/16] 0.0, 128
      %389 = vxpose.xlu0.b32.cont [5/16] 0.0, 128
      %390 = vxpose.xlu0.b32.cont [6/16] 0.0, 128
      %391 = vxpose.xlu0.b32.cont [7/16] 0.0, 128
      %392 = vxpose.xlu0.b32.cont [8/16] 0.0, 128
      %393 = vxpose.xlu0.b32.cont [9/16] 0.0, 128
      %394 = vxpose.xlu0.b32.cont [10/16] 0.0, 128
      %395 = vxpose.xlu0.b32.cont [11/16] 0.0, 128
      %396 = vxpose.xlu0.b32.cont [12/16] 0.0, 128
      %397 = vxpose.xlu0.b32.cont [13/16] 0.0, 128
      %398 = vxpose.xlu0.b32.cont [14/16] 0.0, 128
      %399 = vxpose.xlu0.b32.cont [15/16] 0.0, 128
      %400 = vxpose.xlu0.b32.end [16/16] 0.0, 128
      %v401 = vpop.trf.xlu0
      %v402 = vpop.trf.xlu0
      %v403 = vpop.trf.xlu0
      %v404 = vpop.trf.xlu0
      %v405 = vpop.trf.xlu0
      %v406 = vpop.trf.xlu0
      %v407 = vpop.trf.xlu0
      %v408 = vpop.trf.xlu0
      %v409 = vpop.trf.xlu0
      %v410 = vpop.trf.xlu0
      %v411 = vpop.trf.xlu0
      %v412 = vpop.trf.xlu0
      %v413 = vpop.trf.xlu0
      %v414 = vpop.trf.xlu0
      %v415 = vpop.trf.xlu0
      %v416 = vpop.trf.xlu0
      %vm417 = vcmask 64512
      %418 = vst.msk [vmem:[%s306] sm:$0xff] %vm417, %v401
      %419 = vst.msk [vmem:[%s306 + $0x8] sm:$0xff] %vm417, %v402
      %420 = vst.msk [vmem:[%s306 + $0x10] sm:$0xff] %vm417, %v403
      %421 = vst.msk [vmem:[%s306 + $0x18] sm:$0xff] %vm417, %v404
      %p422 = scmp.lt.s32.totalorder %s22, 1
      %s423 = scalar_select %p422, %s22, 1
      %p424 = scmp.lt.s32.totalorder %s23, 0
      %s425 = scalar_select %p424, %s23, 0
      %s426 = smul.addr %s423, 4
      %s427 = sadd.s32 %s425, %s426
      %s428 = smul.addr %s427, 8
      %s429 = scalar_lea.vmem %s7, %s428
      // Predicated region
      $region49: #{tpu_custom_call.1} parent=47 // pred_check
        %p430 = pneg %p204
      $region50: #{tpu_custom_call.1} parent=47 // pred_check_branch
        %432 = sbr.rel (%p430) target = $region52
      $region51: #{tpu_custom_call.1} parent=47 // pred_region
        _
      $region52: #{tpu_custom_call.1} parent=47 // pred_fallthru
        _
    $region48: #{tpu_custom_call.1} parent=5 // pred_fallthru
      _
    %p433 = scmp.le.s32.totalorder 2, %s13
    // Predicated region
    $region53: #{tpu_custom_call.1} parent=5 // pred_check
      %p434 = pneg %p433
    $region54: #{tpu_custom_call.1} parent=5 // pred_check_branch
      %436 = sbr.rel (%p434) target = $region56
    $region55: #{tpu_custom_call.1} parent=5 // pred_region
      %s437 = ssub.s32 %s13, 2
      // Predicated region
      $region57: #{tpu_custom_call.1} parent=55 // pred_check
        %p438 = pneg %p210
      $region58: #{tpu_custom_call.1} parent=55 // pred_check_branch
        %440 = sbr.rel (%p438) target = $region60
      $region59: #{tpu_custom_call.1} parent=55 // pred_region
        %p441 = scmp.lt.s32.totalorder %s24, 1
        %s442 = scalar_select %p441, %s24, 1
        %p443 = scmp.lt.s32.totalorder %s25, 0
        %s444 = scalar_select %p443, %s25, 0
        %s445 = smul.addr %s442, 4
        %s446 = sadd.s32 %s444, %s445
        %s447 = smul.addr %s446, 8
        %s448 = scalar_lea.vmem %s7, %s447
      $region60: #{tpu_custom_call.1} parent=55 // pred_fallthru
        _
    $region56: #{tpu_custom_call.1} parent=5 // pred_fallthru
      _
  $region6: #{tpu_custom_call.1} parent=0 // loop_footer
    %s17 = sadd.s32 1, %s13
  $region7: #{tpu_custom_call.1} parent=0 // loop_footer_branch
    %12 = sbr.rel target = $region3
  $region8: #{tpu_custom_call.1} parent=0 // loop_exit
    _

</llo_original>
